<compile_context>
chip_gen: v7x
topology: tpu7x:2x2x1
jax: 0.10.0
libtpu: 0.0.40
codegen_flags: <defaults>
</compile_context>

<pallas_src>
import jax
import jax.numpy as jnp
from jax.experimental import pallas as pl
from jax.experimental.pallas import tpu as pltpu


# ----------------------------------------------------------------------------
# Glue: dense bilinear sampling matrix equivalent to
#       F.grid_sample(x, F.affine_grid(theta, size), align_corners=False)
# ----------------------------------------------------------------------------
def _affine_sample_matrix(theta, H_out, W_out, H_in, W_in):
    """theta: (chan, 2, 3). Returns S: (chan, H_out*W_out, H_in*W_in) so that
    sampled[c] = S[c] @ flatten(input[c])."""
    chan = theta.shape[0]
    xs = 2.0 * (jnp.arange(W_out, dtype=jnp.float32) + 0.5) / W_out - 1.0
    ys = 2.0 * (jnp.arange(H_out, dtype=jnp.float32) + 0.5) / H_out - 1.0
    gy, gx = jnp.meshgrid(ys, xs, indexing="ij")               # (H_out, W_out)
    base = jnp.stack([gx, gy, jnp.ones_like(gx)], axis=-1)     # (H_out, W_out, 3)
    src = jnp.einsum("cij,hwj->chwi", theta, base)             # (chan, H_out, W_out, 2)
    ix = (src[..., 0] + 1.0) * W_in / 2.0 - 0.5                # unnormalized x (width)
    iy = (src[..., 1] + 1.0) * H_in / 2.0 - 0.5                # unnormalized y (height)
    ix0 = jnp.floor(ix); iy0 = jnp.floor(iy)
    ix1 = ix0 + 1.0;     iy1 = iy0 + 1.0
    wx1 = ix - ix0; wx0 = 1.0 - wx1
    wy1 = iy - iy0; wy0 = 1.0 - wy1
    n_in = H_in * W_in

    def corner(xc, yc, w):
        valid = (xc >= 0) & (xc <= W_in - 1) & (yc >= 0) & (yc <= H_in - 1)
        xi = jnp.clip(xc.astype(jnp.int32), 0, W_in - 1)
        yi = jnp.clip(yc.astype(jnp.int32), 0, H_in - 1)
        flat = yi * W_in + xi                                   # (chan, H_out, W_out)
        onehot = jax.nn.one_hot(flat, n_in, dtype=jnp.float32)
        w_eff = (w * valid.astype(jnp.float32))[..., None]
        return (onehot * w_eff).reshape(chan, H_out * W_out, n_in)

    return (corner(ix0, iy0, wx0 * wy0) + corner(ix1, iy0, wx1 * wy0)
            + corner(ix0, iy1, wx0 * wy1) + corner(ix1, iy1, wx1 * wy1))


# ----------------------------------------------------------------------------
# Pallas kernel: per-channel sampling matmul on the MXU (f32 accumulation)
# ----------------------------------------------------------------------------
def _geom_sample_kernel(y_ref, st_ref, o_ref):
    # y_ref : VMEM (1, TB, HWin)   BN-folded, channel-mixed input, channel c
    # st_ref: VMEM (1, HWin, TN)   box-masked transposed sampling matrix, channel c
    # o_ref : VMEM (1, TB, TN)     f32 lane-dense output slab
    o_ref[0] = jnp.dot(y_ref[0], st_ref[0], preferred_element_type=jnp.float32)


# ----------------------------------------------------------------------------
# Tiling / VMEM helpers
# ----------------------------------------------------------------------------
def _round_up(n, m):
    return ((n + m - 1) // m) * m


def _vmem_capacity_bytes():
    try:
        info = pltpu.get_tpu_info()
        return int(getattr(info, "vmem_capacity_bytes", 64 << 20))
    except Exception:
        return 64 << 20                      # v7x-safe fallback


def _vmem_needed(tb, tn, hw_in, bpe):
    return (2 * tb * hw_in * bpe             # y block (double-buffered)
            + 2 * hw_in * tn * bpe           # St block (double-buffered)
            + 2 * tb * tn * 4                # f32 output block (double-buffered)
            + tb * tn * 4                    # MXU result before the store
            + (2 << 20))                     # layout / scratch margin


def _tb_candidates(B):
    cands = {B}                              # full batch is always legal
    t = 8
    while t <= B:
        if B % t == 0:
            cands.add(t)                     # multiples of 8 (sublane aligned)
        t *= 2
    return sorted(cands, reverse=True)


def _choose_tiles(B, hw_in, hw_out_pad, bpe, budget):
    tn_cands = [t for t in range(hw_out_pad, 0, -128) if hw_out_pad % t == 0]
    tb_cands = _tb_candidates(B)
    for tn in tn_cands:                      # maximise the lane (output) tile first
        for tb in tb_cands:                  # then the batch tile
            if _vmem_needed(tb, tn, hw_in, bpe) <= budget:
                return tb, tn
    # Nothing fits the budget even at the smallest tiles.
    # TODO(synk): add a K (HWin) reduction grid axis + VMEM accumulator here.
    return tb_cands[-1], tn_cands[-1]


# ----------------------------------------------------------------------------
# Wrapper (glue + pallas_call)
# ----------------------------------------------------------------------------
def geom_layer_forward(x, geoParams, linComb, boxParams=None,
                       use_batchnorm=True, stride=1,
                       operand_dtype=jnp.bfloat16):
    B, inChan, H, W = x.shape
    chan = linComb.shape[0]
    x = x.astype(jnp.float32)
    linComb = linComb.astype(jnp.float32)

    eps = 1e-5
    if use_batchnorm:
        mean = jnp.mean(x, axis=(0, 2, 3))
        var = jnp.var(x, axis=(0, 2, 3))                 # biased var (BN train mode)
        invstd = 1.0 / jnp.sqrt(var + eps)
    else:
        mean = jnp.zeros((inChan,), jnp.float32)
        invstd = jnp.ones((inChan,), jnp.float32)

    # centre crop (stride > 1) realised by selecting output rows of S
    if stride > 1:
        ctr = (H // 2, W // 2)
        win = (H // stride, W // stride)
        r0 = ctr[0] - win[0] // 2; r1 = ctr[0] + win[0] // 2
        c0 = ctr[1] - win[1] // 2; c1 = ctr[1] + win[1] // 2
        Hc, Wc = r1 - r0, c1 - c0
    else:
        r0, c0, Hc, Wc = 0, 0, H, W

    HWin, HWout = H * W, Hc * Wc
    HWout_pad = max(128, _round_up(HWout, 128))          # lane-dense output stores

    # ---- XLA glue: hoisted BatchNorm + channel mix (kills the x refetch) ----
    lin_eff = linComb * invstd[None, :]                                  # (chan, inChan)
    chan_bias = lin_eff @ mean                                           # (chan,)
    x_flat = x.reshape(B, inChan, HWin)
    y = jnp.einsum("ci,bip->cbp", lin_eff, x_flat) - chan_bias[:, None, None]
    y = y.astype(operand_dtype)                                          # (chan, B, HWin)

    # ---- Dense bilinear sampling operator (exact grid_sample equivalent) ----
    S = _affine_sample_matrix(geoParams.astype(jnp.float32), H, W, H, W)  # (chan, HW, HW)
    if stride > 1:
        S = S.reshape(chan, H, W, HWin)[:, r0:r0 + Hc, c0:c0 + Wc, :]
        S = S.reshape(chan, HWout, HWin)
    if boxParams is not None:
        # box = grid_sample(ones on the CROPPED grid) -> row-sums of the box matrix
        box = _affine_sample_matrix(boxParams.astype(jnp.float32),
                                    Hc, Wc, Hc, Wc).sum(-1)              # (chan, HWout)
    else:
        box = jnp.ones((chan, HWout), jnp.float32)

    St_masked = jnp.swapaxes(S, 1, 2) * box[:, None, :]                  # (chan, HWin, HWout)
    if HWout_pad != HWout:
        St_masked = jnp.pad(St_masked, ((0, 0), (0, 0), (0, HWout_pad - HWout)))
    St_masked = St_masked.astype(operand_dtype)

    # ---- Tiling sized against the real VMEM budget (no limit clamping) ------
    bpe = jnp.dtype(operand_dtype).itemsize
    budget = int(_vmem_capacity_bytes() * 0.85)
    TB, TN = _choose_tiles(B, HWin, HWout_pad, bpe, budget)
    n_b, n_out = B // TB, HWout_pad // TN
    vmem_limit = int(min(max(_vmem_needed(TB, TN, HWin, bpe) + (4 << 20), 32 << 20),
                         budget))

    # ---- Traffic-aware ordering of the two inner grid axes ------------------
    #   A: batch innermost    -> y re-streamed n_out times, St fetched once
    #   B: out-tile innermost -> St re-streamed n_b times, y fetched once
    traffic_a = n_out * B * HWin * bpe + HWout_pad * HWin * bpe
    traffic_b = B * HWin * bpe + n_b * HWout_pad * HWin * bpe
    if traffic_a <= traffic_b:
        grid = (chan, n_out, n_b)
        y_map  = lambda c, n, b: (c, b, 0)
        st_map = lambda c, n, b: (c, 0, n)   # constant across inner b -> DMA'd once
        o_map  = lambda c, n, b: (c, b, n)
    else:
        grid = (chan, n_b, n_out)
        y_map  = lambda c, b, n: (c, b, 0)   # constant across inner n -> DMA'd once
        st_map = lambda c, b, n: (c, 0, n)
        o_map  = lambda c, b, n: (c, b, n)

    out = pl.pallas_call(
        _geom_sample_kernel,
        out_shape=jax.ShapeDtypeStruct((chan, B, HWout_pad), jnp.float32),
        grid_spec=pltpu.PrefetchScalarGridSpec(
            num_scalar_prefetch=0,
            grid=grid,
            in_specs=[
                pl.BlockSpec((1, TB, HWin), y_map),
                pl.BlockSpec((1, HWin, TN), st_map),
            ],
            out_specs=pl.BlockSpec((1, TB, TN), o_map),
        ),
        compiler_params=pltpu.CompilerParams(
            dimension_semantics=("parallel", "parallel", "parallel"),
            vmem_limit_bytes=vmem_limit),
    )(y, St_masked)

    out = out[:, :, :HWout]                                   # drop lane padding
    return jnp.transpose(out, (1, 0, 2)).reshape(B, chan, Hc, Wc)


# ----------------------------------------------------------------------------
# Pure-JAX reference (same math, no Pallas) used as a consistency check
# ----------------------------------------------------------------------------
def _reference(x, geoParams, linComb, boxParams, stride=1):
    B, inChan, H, W = x.shape
    chan = linComb.shape[0]
    mean = jnp.mean(x, axis=(0, 2, 3))
    var = jnp.var(x, axis=(0, 2, 3))
    xn = (x - mean[None, :, None, None]) / jnp.sqrt(var + 1e-5)[None, :, None, None]
    y = jnp.einsum("ci,bihw->bchw", linComb, xn).reshape(B, chan, H * W)
    S = _affine_sample_matrix(geoParams, H, W, H, W)
    z = jnp.einsum("cpq,bcq->bcp", S, y).reshape(B, chan, H, W)
    if stride > 1:
        ctr = (H // 2, W // 2)
        win = (H // stride, W // stride)
        z = z[:, :, ctr[0] - win[0] // 2:ctr[0] + win[0] // 2,
                    ctr[1] - win[1] // 2:ctr[1] + win[1] // 2]
    Hc, Wc = z.shape[-2], z.shape[-1]
    if boxParams is not None:
        box = _affine_sample_matrix(boxParams, Hc, Wc, Hc, Wc).sum(-1)
        z = z * box.reshape(1, chan, Hc, Wc)
    return z


if __name__ == "__main__":
    B, inChan, chan, H, W = 2, 4, 4, 16, 16

    key = jax.random.PRNGKey(0)
    k1, k2, k3, k4 = jax.random.split(key, 4)
    eye23 = jnp.eye(3, dtype=jnp.float32)[:2]                     # (2, 3)
    geoParams = jnp.broadcast_to(eye23, (chan, 2, 3)) + 0.1 * jax.random.normal(k1, (chan, 2, 3))
    boxParams = jnp.broadcast_to(eye23, (chan, 2, 3)) + 0.1 * jax.random.normal(k2, (chan, 2, 3))
    linComb = jax.random.uniform(k3, (chan, inChan), dtype=jnp.float32)
    x = jax.random.normal(k4, (B, inChan, H, W), dtype=jnp.float32)

    for stride in (1, 2):                     # plain and centre-cropped paths
        ref = _reference(x, geoParams, linComb, boxParams, stride=stride)

        # exact f32 dot-operand path
        out_f32 = geom_layer_forward(x, geoParams, linComb, boxParams,
                                     use_batchnorm=True, stride=stride,
                                     operand_dtype=jnp.float32)
        out_f32 = jax.block_until_ready(out_f32)
        assert out_f32.shape == ref.shape, (out_f32.shape, ref.shape)
        err = float(jnp.max(jnp.abs(out_f32 - ref)))
        assert err < 2e-3, ("f32", stride, err)

        # default bf16 dot-operand path (f32 accumulation/output)
        out_bf16 = geom_layer_forward(x, geoParams, linComb, boxParams,
                                      use_batchnorm=True, stride=stride,
                                      operand_dtype=jnp.bfloat16)
        out_bf16 = jax.block_until_ready(out_bf16)
        assert out_bf16.shape == ref.shape, (out_bf16.shape, ref.shape)
        err_bf = float(jnp.max(jnp.abs(out_bf16 - ref)))
        assert err_bf < 1e-1, ("bf16", stride, err_bf)

    print("KERNEL_OK")
</pallas_src>

<mosaic_0001>
module attributes {stable_mosaic.version = 11 : i64} {
  func.func @_geom_sample_kernel(%arg0: i32, %arg1: i32, %arg2: i32, %arg3: memref<1x2x256xf32, #tpu.memory_space<vmem>>, %arg4: memref<1x256x256xf32, #tpu.memory_space<vmem>>, %arg5: memref<1x2x256xf32, #tpu.memory_space<vmem>>) attributes {dimension_semantics = [#tpu.dimension_semantics<parallel>, #tpu.dimension_semantics<parallel>, #tpu.dimension_semantics<parallel>], iteration_bounds = array<i64: 4, 1, 1>, scalar_prefetch = 0 : i64, scratch_operands = 0 : i64, tpu.core_type = #tpu.core_type<tc>, window_params = [{transform_indices = @transform_0, window_bounds = array<i64: 1, 2, 256>}, {transform_indices = @transform_1, window_bounds = array<i64: 1, 256, 256>}, {transform_indices = @transform_2, window_bounds = array<i64: 1, 2, 256>}]} {
    %c0 = arith.constant 0 : index
    %c0_0 = arith.constant 0 : index
    %c0_1 = arith.constant 0 : index
    %0 = vector.load %arg3[%c0, %c0_0, %c0_1] : memref<1x2x256xf32, #tpu.memory_space<vmem>>, vector<1x2x256xf32>
    %1 = vector.shape_cast %0 : vector<1x2x256xf32> to vector<2x256xf32>
    %c0_2 = arith.constant 0 : index
    %c0_3 = arith.constant 0 : index
    %c0_4 = arith.constant 0 : index
    %2 = vector.load %arg4[%c0_2, %c0_3, %c0_4] : memref<1x256x256xf32, #tpu.memory_space<vmem>>, vector<1x256x256xf32>
    %3 = vector.shape_cast %2 : vector<1x256x256xf32> to vector<256x256xf32>
    %cst = arith.constant dense<0.000000e+00> : vector<2x256xf32>
    %4 = tpu.matmul %1, %3, %cst {dimension_numbers = #tpu.dot_dimension_numbers<[1], [0], [0], [1], [0, 0, 1, 1], [], []>} : vector<2x256xf32>, vector<256x256xf32>, vector<2x256xf32> -> vector<2x256xf32>
    %c0_5 = arith.constant 0 : index
    %c0_6 = arith.constant 0 : index
    %c0_7 = arith.constant 0 : index
    %5 = vector.load %arg5[%c0_5, %c0_6, %c0_7] : memref<1x2x256xf32, #tpu.memory_space<vmem>>, vector<1x2x256xf32>
    %6 = vector.shape_cast %5 : vector<1x2x256xf32> to vector<2x256xf32>
    %7 = vector.shape_cast %4 : vector<2x256xf32> to vector<1x2x256xf32>
    tpu.vector_store %arg5[%c0_5, %c0_6, %c0_7], %7 {strides = array<i32>} : memref<1x2x256xf32, #tpu.memory_space<vmem>>, vector<1x2x256xf32>,
    return
  }
  func.func @transform_0(%arg0: i32, %arg1: i32, %arg2: i32) -> (i32, i32, i32) {
    %c0_i32 = arith.constant 0 : i32
    %c0_i32_0 = arith.constant 0 : i32
    return %arg0, %arg2, %c0_i32 : i32, i32, i32
  }
  func.func @transform_1(%arg0: i32, %arg1: i32, %arg2: i32) -> (i32, i32, i32) {
    %c0_i32 = arith.constant 0 : i32
    %c0_i32_0 = arith.constant 0 : i32
    return %arg0, %c0_i32, %arg1 : i32, i32, i32
  }
  func.func @transform_2(%arg0: i32, %arg1: i32, %arg2: i32) -> (i32, i32, i32) {
    %c0_i32 = arith.constant 0 : i32
    return %arg0, %arg2, %arg1 : i32, i32, i32
  }
}

</mosaic_0001>

<llo_original>
// kernel: tpu_custom_call.1
$region0: #{tpu_custom_call.1}
  #allocation0 [shape = 'u32[]', space=smem, size = 0x4, offset = 0x4, fixed_abs, tag = 'smem constant byte address 0x4 - core index']
  #allocation1 [shape = 'u32[144,128]{1,0:T(1,128)}', space=vmem, size = 0x12000, scoped, tag = 'internal scratch']
  %s0 = inlined_call_operand.hbm [shape: f32[4,2,256], index: 0, kind: input, shape index: {}]
  %s1 = inlined_call_operand.hbm [shape: f32[4,256,256], index: 1, kind: input, shape index: {}]
  %s2 = inlined_call_operand.hbm [shape: f32[4,2,256], index: 2, kind: output, shape index: {}]
  %s3 = sld [smem:[#allocation0]]
  $region49: #{tpu_custom_call.1} parent=0
    _
  %s5 = ssub.s32 1, %s3
  %s6 = scalar_select 0, %s5, %s3
  $region1: #{tpu_custom_call.1} parent=0
    #allocation2 [shape = 'u8[4096]{0}', space=vmem, size = 0x1000, scoped, tag = 'input window, operand 0']
    #allocation3 [shape = 's32[2]{0}', space=sflag, size = 0x8, scoped, tag = 'scoped memory for tpu_custom_call.1']
    #allocation4 [shape = 's32[2]{0}', space=sflag, size = 0x8, scoped, tag = 'scoped memory for tpu_custom_call.1']
    #allocation5 [shape = 'u8[524288]{0}', space=vmem, size = 0x80000, scoped, tag = 'input window, operand 1']
    #allocation6 [shape = 's32[2]{0}', space=sflag, size = 0x8, scoped, tag = 'scoped memory for tpu_custom_call.1']
    #allocation7 [shape = 'u8[4096]{0}', space=vmem, size = 0x1000, scoped, tag = 'output window, operand 0']
    %7 = vsyncpa [#allocation3], 0
    %s8 = scalar_lea.sflag [#allocation3], 1
    %9 = vsyncpa %s8, 0
    %10 = vsyncpa [#allocation6], 0
    %s11 = scalar_lea.sflag [#allocation6], 1
    %12 = vsyncpa %s11, 0
    %13 = vsyncpa [#allocation4], 0
    %s14 = scalar_lea.sflag [#allocation4], 1
    %15 = vsyncpa %s14, 0
    loop: start=0, step=1, limit=6
    $region2: #{tpu_custom_call.1} parent=1 // loop_pre_header
      _
    $region3: #{tpu_custom_call.1} parent=1 // loop_header
      %s17 = sphi 0, %s21
      %p18 = scmp.ge.s32.totalorder %s17, 6
      %s24 = sphi 0, %s43
      %s25 = sphi 0, %s39
      %s26 = sphi 0, %s35
      %s27 = sphi 0, %s24
      %s28 = sphi 0, %s25
      %s29 = sphi 0, %s26
      %s30 = sphi 0, %s27
      %s31 = sphi 0, %s28
      %s32 = sphi 0, %s29
      %s48 = sphi 0, %s50
      %s51 = sphi 0, %s48
      %s52 = sphi 0, %s51
      %s68 = sphi 0, %s52
      %s76 = sphi 0, %s78
      %s79 = sphi 0, %s76
      %s80 = sphi 0, %s79
      %s96 = sphi 0, %s80
      %s106 = sphi 0, %s108
      %s109 = sphi 0, %s106
      %s110 = sphi 0, %s109
      %s126 = sphi 0, %s110
    $region4: #{tpu_custom_call.1} parent=1 // loop_header_branch
      %20 = sbr.rel (%p18) target = $region8
    $region5: #{tpu_custom_call.1} parent=1 // loop_body
      %s22 = ssub.s32 %s17, 1
      %s23 = ssub.s32 %s17, 2
      %s33 = sadd.s32 1, %s26
      %p34 = scmp.ge.s32.totalorder %s33, 1
      %s35 = scalar_select %p34, 0, %s33
      %s36 = sadd.s32 1, %s25
      %s37 = scalar_select %p34, %s36, %s25
      %p38 = scmp.ge.s32.totalorder %s37, 1
      %s39 = scalar_select %p38, 0, %s37
      %s40 = sadd.s32 1, %s24
      %s41 = scalar_select %p38, %s40, %s24
      %p42 = scmp.ge.s32.totalorder %s41, 4
      %s43 = scalar_select %p42, 0, %s41
      %s44 = ssub.s32 %s24, %s43
      %s45 = ssub.s32 %s26, %s35
      %s46 = sor.u32 %s44, %s45
      %p47 = scmp.eq.s32.totalorder %s46, 0
      %s49 = sadd.s32 %s48, 1
      %s50 = scalar_select %p47, %s48, %s49
      %p53 = pneg %p47
      %p54 = scmp.eq.s32.totalorder %s17, 3
      %p55 = por %p53, %p54
      %p56 = scmp.ne.s32.totalorder %s48, %s51
      %p57 = scmp.eq.s32.totalorder %s17, 0
      %p58 = por %p56, %p57
      %p59 = scmp.ne.s32.totalorder %s48, %s51
      %p60 = scmp.eq.s32.totalorder %s22, 3
      %p61 = por %p59, %p60
      %p62 = scmp.ne.s32.totalorder %s51, %s52
      %p63 = scmp.eq.s32.totalorder %s22, 0
      %p64 = por %p62, %p63
      %p65 = scmp.ne.s32.totalorder %s51, %s52
      %p66 = scmp.eq.s32.totalorder %s23, 3
      %p67 = por %p65, %p66
      %p69 = scmp.ne.s32.totalorder %s52, %s68
      %p70 = scmp.eq.s32.totalorder %s23, 0
      %p71 = por %p69, %p70
      %s72 = ssub.s32 %s24, %s43
      %s73 = ssub.s32 %s25, %s39
      %s74 = sor.u32 %s72, %s73
      %p75 = scmp.eq.s32.totalorder %s74, 0
      %s77 = sadd.s32 %s76, 1
      %s78 = scalar_select %p75, %s76, %s77
      %p81 = pneg %p75
      %p82 = scmp.eq.s32.totalorder %s17, 3
      %p83 = por %p81, %p82
      %p84 = scmp.ne.s32.totalorder %s76, %s79
      %p85 = scmp.eq.s32.totalorder %s17, 0
      %p86 = por %p84, %p85
      %p87 = scmp.ne.s32.totalorder %s76, %s79
      %p88 = scmp.eq.s32.totalorder %s22, 3
      %p89 = por %p87, %p88
      %p90 = scmp.ne.s32.totalorder %s79, %s80
      %p91 = scmp.eq.s32.totalorder %s22, 0
      %p92 = por %p90, %p91
      %p93 = scmp.ne.s32.totalorder %s79, %s80
      %p94 = scmp.eq.s32.totalorder %s23, 3
      %p95 = por %p93, %p94
      %p97 = scmp.ne.s32.totalorder %s80, %s96
      %p98 = scmp.eq.s32.totalorder %s23, 0
      %p99 = por %p97, %p98
      %s100 = ssub.s32 %s24, %s43
      %s101 = ssub.s32 %s26, %s35
      %s102 = sor.u32 %s100, %s101
      %s103 = ssub.s32 %s25, %s39
      %s104 = sor.u32 %s102, %s103
      %p105 = scmp.eq.s32.totalorder %s104, 0
      %s107 = sadd.s32 %s106, 1
      %s108 = scalar_select %p105, %s106, %s107
      %p111 = pneg %p105
      %p112 = scmp.eq.s32.totalorder %s17, 3
      %p113 = por %p111, %p112
      %p114 = scmp.ne.s32.totalorder %s106, %s109
      %p115 = scmp.eq.s32.totalorder %s17, 0
      %p116 = por %p114, %p115
      %p117 = scmp.ne.s32.totalorder %s106, %s109
      %p118 = scmp.eq.s32.totalorder %s22, 3
      %p119 = por %p117, %p118
      %p120 = scmp.ne.s32.totalorder %s109, %s110
      %p121 = scmp.eq.s32.totalorder %s22, 0
      %p122 = por %p120, %p121
      %p123 = scmp.ne.s32.totalorder %s109, %s110
      %p124 = scmp.eq.s32.totalorder %s23, 3
      %p125 = por %p123, %p124
      %p127 = scmp.ne.s32.totalorder %s110, %s126
      %p128 = scmp.eq.s32.totalorder %s23, 0
      %p129 = por %p127, %p128
      %p130 = scmp.le.s32.totalorder 1, %s17
      %p131 = scmp.lt.s32.totalorder %s17, 5
      %p132 = pnand %p130, %p131
      %p133 = pneg %p132
      // Predicated region
      $region9: #{tpu_custom_call.1} parent=5 // pred_check
        _
      $region10: #{tpu_custom_call.1} parent=5 // pred_check_branch
        %135 = sbr.rel (%p132) target = $region12
      $region11: #{tpu_custom_call.1} parent=5 // pred_region
        %s136 = ssub.s32 %s17, 1
      $region12: #{tpu_custom_call.1} parent=5 // pred_fallthru
        _
      %p137 = scmp.lt.s32.totalorder %s17, 4
      // Predicated region
      $region13: #{tpu_custom_call.1} parent=5 // pred_check
        %p138 = pneg %p137
      $region14: #{tpu_custom_call.1} parent=5 // pred_check_branch
        %140 = sbr.rel (%p138) target = $region16
      $region15: #{tpu_custom_call.1} parent=5 // pred_region
        // Predicated region
        $region17: #{tpu_custom_call.1} parent=15 // pred_check
          %p141 = pneg %p58
        $region18: #{tpu_custom_call.1} parent=15 // pred_check_branch
          %143 = sbr.rel (%p141) target = $region20
        $region19: #{tpu_custom_call.1} parent=15 // pred_region
          %s144 = sand.u32 %s48, 1
          %s145 = scalar_lea.sflag [#allocation3], %s144
          %s146 = sand.u32 %s48, 1
          %s147 = smul.addr %s146, 4
          %s148 = scalar_lea.vmem [#allocation2], %s147
          %s150 = ssub.s32 64, 64
          %151 = vsyncadd %s145, %s150
          %s152 = smul.addr %s26, 2
          %s153 = smul.addr %s24, 2
          %s154 = sadd.s32 %s152, %s153
          %s155 = smul.addr %s154, 32
          %s156 = scalar_lea.hbm %s0, %s155
          %s158 = sshll.u32 %s148, 4
          %s159 = int_to_ptr.vmem [resolvable:$true] %s158
          %161 = dma.hbm_to_vmem [thread:$0]  %s156, 64, %s159, %s145
        $region20: #{tpu_custom_call.1} parent=15 // pred_fallthru
          _
        // Predicated region
        $region21: #{tpu_custom_call.1} parent=15 // pred_check
          %p162 = pneg %p86
        $region22: #{tpu_custom_call.1} parent=15 // pred_check_branch
          %164 = sbr.rel (%p162) target = $region24
        $region23: #{tpu_custom_call.1} parent=15 // pred_region
          %s165 = sand.u32 %s76, 1
          %s166 = scalar_lea.sflag [#allocation6], %s165
          %s167 = sand.u32 %s76, 1
          %s168 = smul.addr %s167, 512
          %s169 = scalar_lea.vmem [#allocation5], %s168
          %s170 = smul.u32 2, %s25
          %s172 = ssub.s32 8192, 8192
          %173 = vsyncadd %s166, %s172
          %s174 = smul.addr %s24, 64
          %s175 = sadd.s32 %s170, %s174
          %s176 = smul.addr %s175, 128
          %s177 = scalar_lea.hbm %s1, %s176
          %s178 = sshll.u32 %s169, 4
          %s179 = int_to_ptr.vmem [resolvable:$true] %s178
          %184 = dma.hbm_to_vmem [thread:$0]  %s177, 8192, %s179, %s166, 256, 256, 16
        $region24: #{tpu_custom_call.1} parent=15 // pred_fallthru
          _
      $region16: #{tpu_custom_call.1} parent=5 // pred_fallthru
        _
      %p185 = scmp.le.s32.totalorder 1, %s17
      %p186 = scmp.lt.s32.totalorder %s17, 5
      %p187 = pnand %p185, %p186
      %p188 = pneg %p187
      // Predicated region
      $region25: #{tpu_custom_call.1} parent=5 // pred_check
        _
      $region26: #{tpu_custom_call.1} parent=5 // pred_check_branch
        %190 = sbr.rel (%p187) target = $region28
      $region27: #{tpu_custom_call.1} parent=5 // pred_region
        %s191 = ssub.s32 %s17, 1
        %s192 = sand.u32 %s51, 1
        %s193 = scalar_lea.sflag [#allocation3], %s192
        %s194 = sand.u32 %s51, 1
        %s195 = smul.addr %s194, 4
        %s196 = scalar_lea.vmem [#allocation2], %s195
        // Predicated region
        $region29: #{tpu_custom_call.1} parent=27 // pred_check
          %p197 = pneg %p64
        $region30: #{tpu_custom_call.1} parent=27 // pred_check_branch
          %199 = sbr.rel (%p197) target = $region32
        $region31: #{tpu_custom_call.1} parent=27 // pred_region
          %200 = dma.done %s193, 64
        $region32: #{tpu_custom_call.1} parent=27 // pred_fallthru
          _
        %s201 = sand.u32 %s79, 1
        %s202 = scalar_lea.sflag [#allocation6], %s201
        %s203 = sand.u32 %s79, 1
        %s204 = smul.addr %s203, 512
        %s205 = scalar_lea.vmem [#allocation5], %s204
        // Predicated region
        $region33: #{tpu_custom_call.1} parent=27 // pred_check
          %p206 = pneg %p92
        $region34: #{tpu_custom_call.1} parent=27 // pred_check_branch
          %208 = sbr.rel (%p206) target = $region36
        $region35: #{tpu_custom_call.1} parent=27 // pred_region
          %209 = dma.done %s202, 8192
        $region36: #{tpu_custom_call.1} parent=27 // pred_fallthru
          _
        %s210 = sand.u32 %s51, 1
        %s211 = scalar_lea.sflag [#allocation3], %s210
        %s212 = sand.u32 %s51, 1
        %s213 = smul.addr %s212, 4
        %s214 = scalar_lea.vmem [#allocation2], %s213
        %p215 = pneg %p64
        %p216 = pneg %p61
        %s217 = sand.u32 %s79, 1
        %s218 = scalar_lea.sflag [#allocation6], %s217
        %s219 = sand.u32 %s79, 1
        %s220 = smul.addr %s219, 512
        %s221 = scalar_lea.vmem [#allocation5], %s220
        %p222 = pneg %p92
        %p223 = pneg %p89
        %p224 = pneg %p122
        %p225 = pneg %p119
        %s226 = sand.u32 %s109, 1
        %s227 = scalar_lea.sflag [#allocation4], %s226
        %s228 = sand.u32 %s109, 1
        %s229 = smul.addr %s228, 4
        %s230 = scalar_lea.vmem [#allocation7], %s229
        %s231 = smul.u32 2, %s28
        %s232 = smul.u32 2, %s28
        %v233 = vld [vmem:[%s196] sm:$0xf]
        %v234 = vld [vmem:[%s205] sm:$0xff]
        %v235 = vld [vmem:[%s205 + $0x8] sm:$0xff]
        %v236 = vld [vmem:[%s205 + $0x10] sm:$0xff]
        %v237 = vld [vmem:[%s205 + $0x18] sm:$0xff]
        %v238 = vld [vmem:[%s205 + $0x20] sm:$0xff]
        %v239 = vld [vmem:[%s205 + $0x28] sm:$0xff]
        %v240 = vld [vmem:[%s205 + $0x30] sm:$0xff]
        %v241 = vld [vmem:[%s205 + $0x38] sm:$0xff]
        %v242 = vld [vmem:[%s205 + $0x40] sm:$0xff]
        %v243 = vld [vmem:[%s205 + $0x48] sm:$0xff]
        %v244 = vld [vmem:[%s205 + $0x50] sm:$0xff]
        %v245 = vld [vmem:[%s205 + $0x58] sm:$0xff]
        %v246 = vld [vmem:[%s205 + $0x60] sm:$0xff]
        %v247 = vld [vmem:[%s205 + $0x68] sm:$0xff]
        %v248 = vld [vmem:[%s205 + $0x70] sm:$0xff]
        %v249 = vld [vmem:[%s205 + $0x78] sm:$0xff]
        %v250 = vld [vmem:[%s205 + $0x80] sm:$0xff]
        %v251 = vld [vmem:[%s205 + $0x88] sm:$0xff]
        %v252 = vld [vmem:[%s205 + $0x90] sm:$0xff]
        %v253 = vld [vmem:[%s205 + $0x98] sm:$0xff]
        %v254 = vld [vmem:[%s205 + $0xa0] sm:$0xff]
        %v255 = vld [vmem:[%s205 + $0xa8] sm:$0xff]
        %v256 = vld [vmem:[%s205 + $0xb0] sm:$0xff]
        %v257 = vld [vmem:[%s205 + $0xb8] sm:$0xff]
        %v258 = vld [vmem:[%s205 + $0xc0] sm:$0xff]
        %v259 = vld [vmem:[%s205 + $0xc8] sm:$0xff]
        %v260 = vld [vmem:[%s205 + $0xd0] sm:$0xff]
        %v261 = vld [vmem:[%s205 + $0xd8] sm:$0xff]
        %v262 = vld [vmem:[%s205 + $0xe0] sm:$0xff]
        %v263 = vld [vmem:[%s205 + $0xe8] sm:$0xff]
        %v264 = vld [vmem:[%s205 + $0xf0] sm:$0xff]
        %v265 = vld [vmem:[%s205 + $0xf8] sm:$0xff]
        %v266 = vld [vmem:[%s205 + $0x100] sm:$0xff]
        %v267 = vld [vmem:[%s205 + $0x108] sm:$0xff]
        %v268 = vld [vmem:[%s205 + $0x110] sm:$0xff]
        %v269 = vld [vmem:[%s205 + $0x118] sm:$0xff]
        %v270 = vld [vmem:[%s205 + $0x120] sm:$0xff]
        %v271 = vld [vmem:[%s205 + $0x128] sm:$0xff]
        %v272 = vld [vmem:[%s205 + $0x130] sm:$0xff]
        %v273 = vld [vmem:[%s205 + $0x138] sm:$0xff]
        %v274 = vld [vmem:[%s205 + $0x140] sm:$0xff]
        %v275 = vld [vmem:[%s205 + $0x148] sm:$0xff]
        %v276 = vld [vmem:[%s205 + $0x150] sm:$0xff]
        %v277 = vld [vmem:[%s205 + $0x158] sm:$0xff]
        %v278 = vld [vmem:[%s205 + $0x160] sm:$0xff]
        %v279 = vld [vmem:[%s205 + $0x168] sm:$0xff]
        %v280 = vld [vmem:[%s205 + $0x170] sm:$0xff]
        %v281 = vld [vmem:[%s205 + $0x178] sm:$0xff]
        %v282 = vld [vmem:[%s205 + $0x180] sm:$0xff]
        %v283 = vld [vmem:[%s205 + $0x188] sm:$0xff]
        %v284 = vld [vmem:[%s205 + $0x190] sm:$0xff]
        %v285 = vld [vmem:[%s205 + $0x198] sm:$0xff]
        %v286 = vld [vmem:[%s205 + $0x1a0] sm:$0xff]
        %v287 = vld [vmem:[%s205 + $0x1a8] sm:$0xff]
        %v288 = vld [vmem:[%s205 + $0x1b0] sm:$0xff]
        %v289 = vld [vmem:[%s205 + $0x1b8] sm:$0xff]
        %v290 = vld [vmem:[%s205 + $0x1c0] sm:$0xff]
        %v291 = vld [vmem:[%s205 + $0x1c8] sm:$0xff]
        %v292 = vld [vmem:[%s205 + $0x1d0] sm:$0xff]
        %v293 = vld [vmem:[%s205 + $0x1d8] sm:$0xff]
        %v294 = vld [vmem:[%s205 + $0x1e0] sm:$0xff]
        %v295 = vld [vmem:[%s205 + $0x1e8] sm:$0xff]
        %v296 = vld [vmem:[%s205 + $0x1f0] sm:$0xff]
        %v297 = vld [vmem:[%s205 + $0x1f8] sm:$0xff]
        %v300 = vunpack.c.l.s4 1983009808
        %v301 = vunpack.c.0.s8 %v300
        %v302 = vlaneseq
        %v303 = vshrl.u32 %v302, 7
        %v304 = vsub.s32 %v301, %v303
        %v305 = vrot.slane %v233, %v304
        %v306 = vcombine.high %v305, %v305
        %309 = vmatprep.subr.mxu0 %v235
        %310 = vmatpush1.msra.mxu0 %v234
        %311 = vmatprep.subr.mxu0 %v237
        %312 = vmatpush1.msra.mxu0 %v236
        %313 = vmatprep.subr.mxu0 %v239
        %314 = vmatpush1.msra.mxu0 %v238
        %315 = vmatprep.subr.mxu0 %v241
        %316 = vmatpush1.msra.mxu0 %v240
        %317 = vmatprep.subr.mxu0 %v243
        %318 = vmatpush1.msra.mxu0 %v242
        %319 = vmatprep.subr.mxu0 %v245
        %320 = vmatpush1.msra.mxu0 %v244
        %321 = vmatprep.subr.mxu0 %v247
        %322 = vmatpush1.msra.mxu0 %v246
        %323 = vmatprep.subr.mxu0 %v249
        %324 = vmatpush1.msra.mxu0 %v248
        %325 = vmatprep.subr.mxu0 %v251
        %326 = vmatpush1.msra.mxu0 %v250
        %327 = vmatprep.subr.mxu0 %v253
        %328 = vmatpush1.msra.mxu0 %v252
        %329 = vmatprep.subr.mxu0 %v255
        %330 = vmatpush1.msra.mxu0 %v254
        %331 = vmatprep.subr.mxu0 %v257
        %332 = vmatpush1.msra.mxu0 %v256
        %333 = vmatprep.subr.mxu0 %v259
        %334 = vmatpush1.msra.mxu0 %v258
        %335 = vmatprep.subr.mxu0 %v261
        %336 = vmatpush1.msra.mxu0 %v260
        %337 = vmatprep.subr.mxu0 %v263
        %338 = vmatpush1.msra.mxu0 %v262
        %339 = vmatprep.subr.mxu0 %v265
        %340 = vmatpush1.msra.mxu0 %v264
        %341 = vmatprep.subr.mxu0 %v267
        %342 = vmatpush1.msra.mxu0 %v266
        %343 = vmatprep.subr.mxu0 %v269
        %344 = vmatpush1.msra.mxu0 %v268
        %345 = vmatprep.subr.mxu0 %v271
        %346 = vmatpush1.msra.mxu0 %v270
        %347 = vmatprep.subr.mxu0 %v273
        %348 = vmatpush1.msra.mxu0 %v272
        %349 = vmatprep.subr.mxu0 %v275
        %350 = vmatpush1.msra.mxu0 %v274
        %351 = vmatprep.subr.mxu0 %v277
        %352 = vmatpush1.msra.mxu0 %v276
        %353 = vmatprep.subr.mxu0 %v279
        %354 = vmatpush1.msra.mxu0 %v278
        %355 = vmatprep.subr.mxu0 %v281
        %356 = vmatpush1.msra.mxu0 %v280
        %357 = vmatprep.subr.mxu0 %v283
        %358 = vmatpush1.msra.mxu0 %v282
        %359 = vmatprep.subr.mxu0 %v285
        %360 = vmatpush1.msra.mxu0 %v284
        %361 = vmatprep.subr.mxu0 %v287
        %362 = vmatpush1.msra.mxu0 %v286
        %363 = vmatprep.subr.mxu0 %v289
        %364 = vmatpush1.msra.mxu0 %v288
        %365 = vmatprep.subr.mxu0 %v291
        %366 = vmatpush1.msra.mxu0 %v290
        %367 = vmatprep.subr.mxu0 %v293
        %368 = vmatpush1.msra.mxu0 %v292
        %369 = vmatprep.subr.mxu0 %v295
        %370 = vmatpush1.msra.mxu0 %v294
        %371 = vmatprep.subr.mxu0 %v297
        %372 = vmatpush1.msra.mxu0 %v296
        %373 = vmatprep.mubr.f32.mxu0 %v306
        %374 = vmatmul.mubr.f32.gmra.mrb[0].mxu0 %v305
        %v375 = vpop.f32.mrb[0].mxu0
        %v376 = vadd.f32 0.0, %v375
        %v377 = vpop.f32.mrb[0].mxu0
        %v378 = vadd.f32 0.0, %v377
        %379 = vdwg.mxu0
        %v382 = vcombine.low %v376, %v378
        %v384 = vunpack.c.l.s4 1983009808
        %v385 = vunpack.c.0.s8 %v384
        %v386 = vlaneseq
        %v387 = vshrl.u32 %v386, 7
        %v388 = vsub.s32 %v385, %v387
        %v389 = vrot.slane %v382, %v388
        %391 = vst [vmem:[%s230] sm:$0xf] %v389
        %s392 = sand.u32 %s109, 1
        %s393 = scalar_lea.sflag [#allocation4], %s392
        %s394 = sand.u32 %s109, 1
        %s395 = smul.addr %s394, 4
        %s396 = scalar_lea.vmem [#allocation7], %s395
        // Predicated region
        $region37: #{tpu_custom_call.1} parent=27 // pred_check
          %p397 = pneg %p119
        $region38: #{tpu_custom_call.1} parent=27 // pred_check_branch
          %399 = sbr.rel (%p397) target = $region40
        $region39: #{tpu_custom_call.1} parent=27 // pred_region
          %s400 = smul.u32 2, %s28
          %s402 = ssub.s32 64, 64
          %403 = vsyncadd %s393, %s402
          %s404 = smul.addr %s29, 2
          %s405 = sadd.s32 %s400, %s404
          %s406 = smul.addr %s27, 2
          %s407 = sadd.s32 %s405, %s406
          %s408 = smul.addr %s407, 32
          %s409 = scalar_lea.hbm %s2, %s408
          %s411 = sshll.u32 %s396, 4
          %s412 = int_to_ptr.vmem [resolvable:$true] %s411
          %414 = dma.vmem_to_hbm [thread:$0]  %s412, 64, %s409, %s393
        $region40: #{tpu_custom_call.1} parent=27 // pred_fallthru
          _
      $region28: #{tpu_custom_call.1} parent=5 // pred_fallthru
        _
      %p415 = scmp.le.s32.totalorder 2, %s17
      // Predicated region
      $region41: #{tpu_custom_call.1} parent=5 // pred_check
        %p416 = pneg %p415
      $region42: #{tpu_custom_call.1} parent=5 // pred_check_branch
        %418 = sbr.rel (%p416) target = $region44
      $region43: #{tpu_custom_call.1} parent=5 // pred_region
        %s419 = ssub.s32 %s17, 2
        // Predicated region
        $region45: #{tpu_custom_call.1} parent=43 // pred_check
          %p420 = pneg %p125
        $region46: #{tpu_custom_call.1} parent=43 // pred_check_branch
          %422 = sbr.rel (%p420) target = $region48
        $region47: #{tpu_custom_call.1} parent=43 // pred_region
          %s423 = sand.u32 %s110, 1
          %s424 = scalar_lea.sflag [#allocation4], %s423
          %s425 = sand.u32 %s110, 1
          %s426 = smul.addr %s425, 4
          %s427 = scalar_lea.vmem [#allocation7], %s426
          %428 = dma.done %s424, 64
        $region48: #{tpu_custom_call.1} parent=43 // pred_fallthru
          _
      $region44: #{tpu_custom_call.1} parent=5 // pred_fallthru
        _
    $region6: #{tpu_custom_call.1} parent=1 // loop_footer
      %s21 = sadd.s32 1, %s17
    $region7: #{tpu_custom_call.1} parent=1 // loop_footer_branch
      %16 = sbr.rel target = $region3
    $region8: #{tpu_custom_call.1} parent=1 // loop_exit
      _
    %429 = vsyncpa [#allocation3], 1
    %s430 = scalar_lea.sflag [#allocation3], 1
    %431 = vsyncpa %s430, 1
    %432 = vsyncpa [#allocation6], 1
    %s433 = scalar_lea.sflag [#allocation6], 1
    %434 = vsyncpa %s433, 1
    %435 = vsyncpa [#allocation4], 1
    %s436 = scalar_lea.sflag [#allocation4], 1
    %437 = vsyncpa %s436, 1

</llo_original>
